<compile_context>
chip_gen: v7x
topology: tpu7x:2x2x1
jax: 0.10.0
libtpu: 0.0.40
codegen_flags: <defaults>
</compile_context>

<pallas_src>
import math
import functools

import jax
import jax.numpy as jnp
from jax.experimental import pallas as pl
from jax.experimental.pallas import tpu as pltpu

LAMBDA_A = 0.8
ROWS = 63    # codeword length n (variable nodes)     -- BCH(63,45)
COLS = 18    # number of parity checks n - k
_LANES = 128
_SUBLANES = 8


def _loss_kernel(pred_flat_ref, y_flat_ref, pred_mat_ref, h_ref, out_ref, *,
                 train, n_a, n_c):
    # ----- loss_a: BCE term on a lane-dense (R8, 128) slab --------------------
    pred = pred_flat_ref[...]                      # (R8, 128) f32, values in (0, 1)
    y = y_flat_ref[...]                            # (R8, 128) f32 {0,1} (padding = 1)
    # y is exactly {0,1}: (1-y)*log(1-p) + y*log(p) == log(where(y>0.5, p, 1-p)).
    # Padding slots carry (pred=1, y=1) -> log(1) = 0 contribution, so sums are exact.
    loss_a = jnp.log(jnp.where(y > 0.5, pred, 1.0 - pred))
    sum_a = jnp.sum(loss_a)

    if train:
        # ----- loss_c: parity term, one (essentially free) MXU pass -----------
        # Computed transposed: (B8, ROWS) @ (ROWS, COLS) -> (B8, COLS).
        # Padded batch rows are all-zero -> loss_b row = 0 -> |sin(0)| = 0.
        loss_b = jnp.dot(pred_mat_ref[...], h_ref[...],
                         preferred_element_type=jnp.float32,
                         precision=jax.lax.Precision.HIGHEST)
        loss_c = jnp.abs(jnp.sin(loss_b * (math.pi / 2.0)))
        sum_c = jnp.sum(loss_c)
        loss = LAMBDA_A * sum_a / (-1.0 * n_a) + (1.0 - LAMBDA_A) * sum_c / n_c
    else:
        loss = sum_a / (-1.0 * n_a)

    out_ref[0, 0] = loss                           # scalar out via SMEM path


def make_loss_func(H, train=1):
    """Returns loss_fn(pred, y) -> scalar.  H: (ROWS, COLS) {0,1}; cast to f32 once here."""
    H32 = jnp.asarray(H, dtype=jnp.float32)        # cast once at setup, not per call
    assert H32.shape == (ROWS, COLS)
    train = bool(train)                            # static: branch resolved at trace time

    @jax.jit
    def loss_fn(pred, y):
        assert pred.shape[0] % ROWS == 0 and pred.shape[1] == 1
        b = pred.shape[0] // ROWS
        n_a = b * ROWS                             # true numel(loss_a) (unpadded)
        n_c = b * COLS                             # true numel(loss_c) (unpadded)

        # Lane-dense slab for the elementwise/EUP phase: pad with neutral (pred=1, y=1).
        r = pl.cdiv(n_a, _LANES)
        r8 = pl.cdiv(r, _SUBLANES) * _SUBLANES
        pad = r8 * _LANES - n_a
        pred_flat = jnp.pad(pred.reshape(-1), (0, pad),
                            constant_values=1.0).reshape(r8, _LANES)
        y_flat = jnp.pad(y.reshape(-1), (0, pad),
                         constant_values=1.0).reshape(r8, _LANES)

        # (B, ROWS) view for the parity matmul; pad batch to a sublane multiple with
        # zero rows (contribute exactly 0 to sum_c).
        b8 = pl.cdiv(b, _SUBLANES) * _SUBLANES
        pred_mat = pred.reshape(b, ROWS)           # row i == pred[i*ROWS:(i+1)*ROWS, 0]
        if b8 != b:
            pred_mat = jnp.pad(pred_mat, ((0, b8 - b), (0, 0)))

        kernel = functools.partial(_loss_kernel, train=train,
                                   n_a=float(n_a), n_c=float(n_c))
        out = pl.pallas_call(
            kernel,
            out_shape=jax.ShapeDtypeStruct((1, 1), jnp.float32),
            in_specs=[pl.BlockSpec(memory_space=pltpu.MemorySpace.VMEM)] * 4,
            out_specs=pl.BlockSpec(memory_space=pltpu.MemorySpace.SMEM),
        )(pred_flat, y_flat, pred_mat, H32)
        return out[0, 0]

    return loss_fn


def _reference(pred, y, H, train=1):
    b = pred.shape[0] // ROWS
    res = pred.reshape(b, ROWS).T                  # (ROWS, B) — columns per sample
    loss_a = (1.0 - y) * jnp.log(1.0 - pred) + y * jnp.log(pred)
    if train:
        loss_b = jnp.matmul(H.T, res, precision=jax.lax.Precision.HIGHEST)  # (COLS, B)
        loss_c = jnp.abs(jnp.sin(loss_b * (math.pi / 2.0)))
        return (LAMBDA_A * jnp.sum(loss_a) / (-1.0 * loss_a.size)
                + (1.0 - LAMBDA_A) * jnp.sum(loss_c) / loss_c.size)
    return jnp.sum(loss_a) / (-1.0 * loss_a.size)


if __name__ == "__main__":
    key = jax.random.PRNGKey(0)
    k_h, k_p, k_y = jax.random.split(key, 3)

    B = 8  # small batch (original script uses 120)

    # Deterministic synthetic parity-check matrix H (ROWS, COLS) of 0/1 floats
    # (stands in for loadtxt('BCH(63,45).txt').t()).
    H = (jax.random.uniform(k_h, (ROWS, COLS)) < 0.5).astype(jnp.float32)

    # Predictions like the decoder output: sigmoid(-logit) then clamp to (1e-7, 1-1e-7).
    raw = jax.random.normal(k_p, (B * ROWS, 1), dtype=jnp.float32)
    pred = jnp.clip(jax.nn.sigmoid(-raw), 1e-7, 1.0 - 1e-7).astype(jnp.float32)

    # Binary targets.
    y = (jax.random.uniform(k_y, (B * ROWS, 1)) < 0.5).astype(jnp.float32)

    loss_fn = make_loss_func(H, train=1)
    loss = loss_fn(pred, y)
    jax.block_until_ready(loss)

    ref = _reference(pred, y, H, train=1)
    assert jnp.allclose(loss, ref, rtol=1e-5, atol=1e-5), (loss, ref)

    # Eval (train=0) path too.
    loss_eval = make_loss_func(H, train=0)(pred, y)
    jax.block_until_ready(loss_eval)
    ref_eval = _reference(pred, y, H, train=0)
    assert jnp.allclose(loss_eval, ref_eval, rtol=1e-5, atol=1e-5), (loss_eval, ref_eval)

    print("KERNEL_OK")
</pallas_src>

<mosaic_0001>
module attributes {stable_mosaic.version = 11 : i64} {
  func.func @_loss_kernel(%arg0: memref<8x128xf32, #tpu.memory_space<vmem>>, %arg1: memref<8x128xf32, #tpu.memory_space<vmem>>, %arg2: memref<8x63xf32, #tpu.memory_space<vmem>>, %arg3: memref<63x18xf32, #tpu.memory_space<vmem>>, %arg4: memref<1x1xf32, #tpu.memory_space<smem>>) attributes {dimension_semantics = [], scalar_prefetch = 0 : i64, scratch_operands = 0 : i64, tpu.core_type = #tpu.core_type<tc>} {
    %c0 = arith.constant 0 : index
    %c0_0 = arith.constant 0 : index
    %0 = vector.load %arg0[%c0, %c0_0] : memref<8x128xf32, #tpu.memory_space<vmem>>, vector<8x128xf32>
    %c0_1 = arith.constant 0 : index
    %c0_2 = arith.constant 0 : index
    %1 = vector.load %arg1[%c0_1, %c0_2] : memref<8x128xf32, #tpu.memory_space<vmem>>, vector<8x128xf32>
    %cst = arith.constant 5.000000e-01 : f32
    %2 = vector.broadcast %cst : f32 to vector<8x128xf32>
    %3 = arith.cmpf ogt, %1, %2 : vector<8x128xf32>
    %cst_3 = arith.constant 1.000000e+00 : f32
    %4 = vector.broadcast %cst_3 : f32 to vector<8x128xf32>
    %5 = arith.subf %4, %0 : vector<8x128xf32>
    %6 = arith.select %3, %0, %5 : vector<8x128xi1>, vector<8x128xf32>
    %7 = math.log %6 : vector<8x128xf32>
    %8 = vector.shape_cast %7 : vector<8x128xf32> to vector<1x8x128xf32>
    %cst_4 = arith.constant dense<0.000000e+00> : vector<1xf32>
    %9 = vector.multi_reduction <add>, %8, %cst_4 [1, 2] : vector<1x8x128xf32> to vector<1xf32>
    %10 = vector.shape_cast %9 : vector<1xf32> to vector<1x1x1xf32>
    %11 = vector.extract %10[0, 0, 0] : f32 from vector<1x1x1xf32>
    %c0_5 = arith.constant 0 : index
    %c0_6 = arith.constant 0 : index
    %12 = vector.load %arg2[%c0_5, %c0_6] : memref<8x63xf32, #tpu.memory_space<vmem>>, vector<8x63xf32>
    %c0_7 = arith.constant 0 : index
    %c0_8 = arith.constant 0 : index
    %13 = vector.load %arg3[%c0_7, %c0_8] : memref<63x18xf32, #tpu.memory_space<vmem>>, vector<63x18xf32>
    %cst_9 = arith.constant dense<0.000000e+00> : vector<8x18xf32>
    %14 = tpu.matmul %12, %13, %cst_9 {dimension_numbers = #tpu.dot_dimension_numbers<[1], [0], [0], [1], [0, 0, 1, 1], [], []>, precision = #tpu.contract_precision<fp32>} : vector<8x63xf32>, vector<63x18xf32>, vector<8x18xf32> -> vector<8x18xf32>
    %cst_10 = arith.constant 1.57079637 : f32
    %15 = vector.broadcast %cst_10 : f32 to vector<8x18xf32>
    %16 = arith.mulf %14, %15 : vector<8x18xf32>
    %17 = math.sin %16 : vector<8x18xf32>
    %18 = math.absf %17 : vector<8x18xf32>
    %19 = vector.shape_cast %18 : vector<8x18xf32> to vector<1x8x18xf32>
    %cst_11 = arith.constant dense<0.000000e+00> : vector<1xf32>
    %20 = vector.multi_reduction <add>, %19, %cst_11 [1, 2] : vector<1x8x18xf32> to vector<1xf32>
    %21 = vector.shape_cast %20 : vector<1xf32> to vector<1x1x1xf32>
    %22 = vector.extract %21[0, 0, 0] : f32 from vector<1x1x1xf32>
    %cst_12 = arith.constant 8.000000e-01 : f32
    %23 = arith.mulf %cst_12, %11 : f32
    %cst_13 = arith.constant -5.040000e+02 : f32
    %24 = arith.divf %23, %cst_13 : f32
    %cst_14 = arith.constant 2.000000e-01 : f32
    %25 = arith.mulf %cst_14, %22 : f32
    %cst_15 = arith.constant 1.440000e+02 : f32
    %26 = arith.divf %25, %cst_15 : f32
    %27 = arith.addf %24, %26 : f32
    %c0_16 = arith.constant 0 : index
    %c0_17 = arith.constant 0 : index
    %28 = memref.load %arg4[%c0_16, %c0_17] : memref<1x1xf32, #tpu.memory_space<smem>>
    memref.store %27, %arg4[%c0_16, %c0_17] : memref<1x1xf32, #tpu.memory_space<smem>>
    return
  }
}

</mosaic_0001>

<llo_original>
// kernel: loss_fn.1
$region0: #{loss_fn.1}
  #allocation0 [shape = 'u32[]', space=smem, size = 0x4, offset = 0x4, fixed_abs, tag = 'smem constant byte address 0x4 - core index']
  #allocation1 [shape = 'u32[144,128]{1,0:T(1,128)}', space=vmem, size = 0x12000, scoped, tag = 'internal scratch']
  %s0 = inlined_call_operand.vmem [shape: f32[8,128], index: 0, kind: input, shape index: {}]
  %s1 = inlined_call_operand.vmem [shape: f32[8,128], index: 1, kind: input, shape index: {}]
  %s2 = inlined_call_operand.vmem [shape: f32[8,63], index: 2, kind: input, shape index: {}]
  %s3 = inlined_call_operand.vmem [shape: f32[63,18], index: 3, kind: input, shape index: {}]
  %s4 = inlined_call_operand.hbm [shape: f32[1,1], index: 4, kind: output, shape index: {}]
  %s5 = sld [smem:[#allocation0]]
  $region26: #{loss_fn.1} parent=0
    _
  %s7 = ssub.s32 1, %s5
  %s8 = scalar_select 0, %s7, %s5
  $region1: #{loss_fn.1} parent=0
    #allocation2 [shape = 'u8[512]{0}', space=smem, size = 0x200, scoped, tag = 'output window, operand 0, single buffered']
    #allocation3 [shape = 's32[1]{0}', space=sflag, size = 0x4, scoped, tag = 'scoped memory for loss_fn.1']
    %9 = vsyncpa [#allocation3], 0
    // Predicated region
    $region2: #{loss_fn.1} parent=1 // pred_check
      _
    $region3: #{loss_fn.1} parent=1 // pred_check_branch
      %11 = sbr.rel (0) target = $region5
    $region4: #{loss_fn.1} parent=1 // pred_region
      _
    $region5: #{loss_fn.1} parent=1 // pred_fallthru
      _
    // Predicated region
    $region6: #{loss_fn.1} parent=1 // pred_check
      _
    $region7: #{loss_fn.1} parent=1 // pred_check_branch
      %13 = sbr.rel (0) target = $region9
    $region8: #{loss_fn.1} parent=1 // pred_region
      _
    $region9: #{loss_fn.1} parent=1 // pred_fallthru
      _
    // Predicated region
    $region10: #{loss_fn.1} parent=1 // pred_check
      _
    $region11: #{loss_fn.1} parent=1 // pred_check_branch
      %15 = sbr.rel (0) target = $region13
    $region12: #{loss_fn.1} parent=1 // pred_region
      _
    $region13: #{loss_fn.1} parent=1 // pred_fallthru
      _
    // Predicated region
    $region14: #{loss_fn.1} parent=1 // pred_check
      _
    $region15: #{loss_fn.1} parent=1 // pred_check_branch
      %17 = sbr.rel (0) target = $region17
    $region16: #{loss_fn.1} parent=1 // pred_region
      _
    $region17: #{loss_fn.1} parent=1 // pred_fallthru
      _
    %v18 = vld [vmem:[%s0] sm:$0xff]
    %v19 = vld [vmem:[%s1] sm:$0xff]
    %vm20 = vcmp.gt.f32.partialorder %v19, 0.5
    %v21 = vsub.f32 1.0, %v18
    %v22 = vsel %vm20, %v18, %v21
    %v23 = vlog2.pop %v22
    %v24 = vmul.f32 %v23, 0.6931472
    %25 = vadd.xlane.f32.xlu0 %v24
    %v26 = vpop.xlane.xlu0 %25
    %v27 = vrot.slane %v26, 4
    %v28 = vadd.f32 %v26, %v27
    %v29 = vrot.slane %v28, 2
    %v30 = vadd.f32 %v28, %v29
    %v31 = vrot.slane %v30, 1
    %v32 = vadd.f32 %v30, %v31
    %s33 = vtos %v32
    %v34 = vld [vmem:[%s2] sm:$0xff]
    %v35 = vld [vmem:[%s3] sm:$0xff]
    %v36 = vld [vmem:[%s3 + $0x8] sm:$0xff]
    %v37 = vld [vmem:[%s3 + $0x10] sm:$0xff]
    %v38 = vld [vmem:[%s3 + $0x18] sm:$0xff]
    %v39 = vld [vmem:[%s3 + $0x20] sm:$0xff]
    %v40 = vld [vmem:[%s3 + $0x28] sm:$0xff]
    %v41 = vld [vmem:[%s3 + $0x30] sm:$0xff]
    %v42 = vld [vmem:[%s3 + $0x38] sm:$0x7f]
    %vm43 = vcmask 515072
    %v45 = vsel %vm43, %v34, 0
    %vm47 = vcmask 1046528
    %v49 = vsel %vm47, %v42, 0
    %51 = vmatprep.subr.mxu0 0.0
    %v52 = vand.u32 %v35, 4294901760
    %53 = vmatpush1.msra.mxu0 %v52
    %54 = vmatprep.subr.mxu0 0.0
    %v55 = vand.u32 %v36, 4294901760
    %56 = vmatpush1.msra.mxu0 %v55
    %57 = vmatprep.subr.mxu0 0.0
    %v58 = vand.u32 %v37, 4294901760
    %59 = vmatpush1.msra.mxu0 %v58
    %60 = vmatprep.subr.mxu0 0.0
    %v61 = vand.u32 %v38, 4294901760
    %62 = vmatpush1.msra.mxu0 %v61
    %63 = vmatprep.subr.mxu0 0.0
    %v64 = vand.u32 %v39, 4294901760
    %65 = vmatpush1.msra.mxu0 %v64
    %66 = vmatprep.subr.mxu0 0.0
    %v67 = vand.u32 %v40, 4294901760
    %68 = vmatpush1.msra.mxu0 %v67
    %69 = vmatprep.subr.mxu0 0.0
    %v70 = vand.u32 %v41, 4294901760
    %71 = vmatpush1.msra.mxu0 %v70
    %72 = vmatprep.subr.mxu0 0.0
    %v73 = vand.u32 %v49, 4294901760
    %74 = vmatpush1.msra.mxu0 %v73
    %75 = vmatprep.subr.mxu0 0.0
    %76 = vmatpush1.msra.mxu0 0.0
    %77 = vmatprep.subr.mxu0 0.0
    %78 = vmatpush1.msra.mxu0 0.0
    %79 = vmatprep.subr.mxu0 0.0
    %80 = vmatpush1.msra.mxu0 0.0
    %81 = vmatprep.subr.mxu0 0.0
    %82 = vmatpush1.msra.mxu0 0.0
    %83 = vmatprep.subr.mxu0 0.0
    %84 = vmatpush1.msra.mxu0 0.0
    %85 = vmatprep.subr.mxu0 0.0
    %86 = vmatpush1.msra.mxu0 0.0
    %87 = vmatprep.subr.mxu0 0.0
    %88 = vmatpush1.msra.mxu0 0.0
    %89 = vmatprep.subr.mxu0 0.0
    %90 = vmatpush1.msra.mxu0 0.0
    %91 = vmatprep.subr.mxu0 0.0
    %92 = vmatpush1.msra.mxu0 0.0
    %93 = vmatprep.subr.mxu0 0.0
    %94 = vmatpush1.msra.mxu0 0.0
    %95 = vmatprep.subr.mxu0 0.0
    %96 = vmatpush1.msra.mxu0 0.0
    %97 = vmatprep.subr.mxu0 0.0
    %98 = vmatpush1.msra.mxu0 0.0
    %99 = vmatprep.subr.mxu0 0.0
    %100 = vmatpush1.msra.mxu0 0.0
    %101 = vmatprep.subr.mxu0 0.0
    %102 = vmatpush1.msra.mxu0 0.0
    %103 = vmatprep.subr.mxu0 0.0
    %104 = vmatpush1.msra.mxu0 0.0
    %105 = vmatprep.subr.mxu0 0.0
    %106 = vmatpush1.msra.mxu0 0.0
    %107 = vmatprep.subr.mxu0 0.0
    %108 = vmatpush1.msra.mxu0 0.0
    %109 = vmatprep.subr.mxu0 0.0
    %110 = vmatpush1.msra.mxu0 0.0
    %111 = vmatprep.subr.mxu0 0.0
    %112 = vmatpush1.msra.mxu0 0.0
    %113 = vmatprep.subr.mxu0 0.0
    %114 = vmatpush1.msra.mxu0 0.0
    %115 = vmatprep.subr.mxu0 0.0
    %116 = vmatpush1.msra.mxu0 0.0
    %117 = vmatprep.subr.mxu0 0.0
    %118 = vmatpush1.msra.mxu0 0.0
    %119 = vmatprep.subr.mxu0 0.0
    %120 = vmatpush1.msra.mxu0 0.0
    %121 = vmatprep.subr.mxu0 0.0
    %122 = vmatpush1.msra.mxu0 0.0
    %123 = vmatprep.mubr.f32.mxu0 0.0
    %v124 = vand.u32 %v45, 4294901760
    %v125 = vsub.f32 %v45, %v124
    %v126 = vand.u32 %v125, 4294901760
    %v127 = vsub.f32 %v125, %v126
    %v128 = vand.u32 %v127, 4294901760
    %129 = vmatmul.mubr.f32.gmra.mrb[0].mxu0 %v128
    %v130 = vpop.f32.mrb[0].mxu0
    %v131 = vadd.f32 0.0, %v130
    %v132 = vpop.f32.mrb[0].mxu0
    %133 = vdwg.mxu0
    %134 = vmatprep.subr.mxu0 0.0
    %v135 = vand.u32 %v35, 4294901760
    %v136 = vsub.f32 %v35, %v135
    %v137 = vand.u32 %v136, 4294901760
    %v138 = vsub.f32 %v136, %v137
    %v139 = vand.u32 %v138, 4294901760
    %140 = vmatpush1.msra.mxu0 %v139
    %141 = vmatprep.subr.mxu0 0.0
    %v142 = vand.u32 %v36, 4294901760
    %v143 = vsub.f32 %v36, %v142
    %v144 = vand.u32 %v143, 4294901760
    %v145 = vsub.f32 %v143, %v144
    %v146 = vand.u32 %v145, 4294901760
    %147 = vmatpush1.msra.mxu0 %v146
    %148 = vmatprep.subr.mxu0 0.0
    %v149 = vand.u32 %v37, 4294901760
    %v150 = vsub.f32 %v37, %v149
    %v151 = vand.u32 %v150, 4294901760
    %v152 = vsub.f32 %v150, %v151
    %v153 = vand.u32 %v152, 4294901760
    %154 = vmatpush1.msra.mxu0 %v153
    %155 = vmatprep.subr.mxu0 0.0
    %v156 = vand.u32 %v38, 4294901760
    %v157 = vsub.f32 %v38, %v156
    %v158 = vand.u32 %v157, 4294901760
    %v159 = vsub.f32 %v157, %v158
    %v160 = vand.u32 %v159, 4294901760
    %161 = vmatpush1.msra.mxu0 %v160
    %162 = vmatprep.subr.mxu0 0.0
    %v163 = vand.u32 %v39, 4294901760
    %v164 = vsub.f32 %v39, %v163
    %v165 = vand.u32 %v164, 4294901760
    %v166 = vsub.f32 %v164, %v165
    %v167 = vand.u32 %v166, 4294901760
    %168 = vmatpush1.msra.mxu0 %v167
    %169 = vmatprep.subr.mxu0 0.0
    %v170 = vand.u32 %v40, 4294901760
    %v171 = vsub.f32 %v40, %v170
    %v172 = vand.u32 %v171, 4294901760
    %v173 = vsub.f32 %v171, %v172
    %v174 = vand.u32 %v173, 4294901760
    %175 = vmatpush1.msra.mxu0 %v174
    %176 = vmatprep.subr.mxu0 0.0
    %v177 = vand.u32 %v41, 4294901760
    %v178 = vsub.f32 %v41, %v177
    %v179 = vand.u32 %v178, 4294901760
    %v180 = vsub.f32 %v178, %v179
    %v181 = vand.u32 %v180, 4294901760
    %182 = vmatpush1.msra.mxu0 %v181
    %183 = vmatprep.subr.mxu0 0.0
    %v184 = vand.u32 %v49, 4294901760
    %v185 = vsub.f32 %v49, %v184
    %v186 = vand.u32 %v185, 4294901760
    %v187 = vsub.f32 %v185, %v186
    %v188 = vand.u32 %v187, 4294901760
    %189 = vmatpush1.msra.mxu0 %v188
    %190 = vmatprep.subr.mxu0 0.0
    %191 = vmatpush1.msra.mxu0 0.0
    %192 = vmatprep.subr.mxu0 0.0
    %193 = vmatpush1.msra.mxu0 0.0
    %194 = vmatprep.subr.mxu0 0.0
    %195 = vmatpush1.msra.mxu0 0.0
    %196 = vmatprep.subr.mxu0 0.0
    %197 = vmatpush1.msra.mxu0 0.0
    %198 = vmatprep.subr.mxu0 0.0
    %199 = vmatpush1.msra.mxu0 0.0
    %200 = vmatprep.subr.mxu0 0.0
    %201 = vmatpush1.msra.mxu0 0.0
    %202 = vmatprep.subr.mxu0 0.0
    %203 = vmatpush1.msra.mxu0 0.0
    %204 = vmatprep.subr.mxu0 0.0
    %205 = vmatpush1.msra.mxu0 0.0
    %206 = vmatprep.subr.mxu0 0.0
    %207 = vmatpush1.msra.mxu0 0.0
    %208 = vmatprep.subr.mxu0 0.0
    %209 = vmatpush1.msra.mxu0 0.0
    %210 = vmatprep.subr.mxu0 0.0
    %211 = vmatpush1.msra.mxu0 0.0
    %212 = vmatprep.subr.mxu0 0.0
    %213 = vmatpush1.msra.mxu0 0.0
    %214 = vmatprep.subr.mxu0 0.0
    %215 = vmatpush1.msra.mxu0 0.0
    %216 = vmatprep.subr.mxu0 0.0
    %217 = vmatpush1.msra.mxu0 0.0
    %218 = vmatprep.subr.mxu0 0.0
    %219 = vmatpush1.msra.mxu0 0.0
    %220 = vmatprep.subr.mxu0 0.0
    %221 = vmatpush1.msra.mxu0 0.0
    %222 = vmatprep.subr.mxu0 0.0
    %223 = vmatpush1.msra.mxu0 0.0
    %224 = vmatprep.subr.mxu0 0.0
    %225 = vmatpush1.msra.mxu0 0.0
    %226 = vmatprep.subr.mxu0 0.0
    %227 = vmatpush1.msra.mxu0 0.0
    %228 = vmatprep.subr.mxu0 0.0
    %229 = vmatpush1.msra.mxu0 0.0
    %230 = vmatprep.subr.mxu0 0.0
    %231 = vmatpush1.msra.mxu0 0.0
    %232 = vmatprep.subr.mxu0 0.0
    %233 = vmatpush1.msra.mxu0 0.0
    %234 = vmatprep.subr.mxu0 0.0
    %235 = vmatpush1.msra.mxu0 0.0
    %236 = vmatprep.subr.mxu0 0.0
    %237 = vmatpush1.msra.mxu0 0.0
    %238 = vmatprep.mubr.f32.mxu0 0.0
    %v239 = vand.u32 %v45, 4294901760
    %240 = vmatmul.mubr.f32.gmra.mrb[0].mxu0 %v239
    %v241 = vpop.f32.mrb[0].mxu0
    %v242 = vadd.f32 %v131, %v241
    %v243 = vpop.f32.mrb[0].mxu0
    %244 = vdwg.mxu0
    %245 = vmatprep.subr.mxu0 0.0
    %v246 = vand.u32 %v35, 4294901760
    %v247 = vsub.f32 %v35, %v246
    %248 = vmatpush1.msra.mxu0 %v247
    %249 = vmatprep.subr.mxu0 0.0
    %v250 = vand.u32 %v36, 4294901760
    %v251 = vsub.f32 %v36, %v250
    %252 = vmatpush1.msra.mxu0 %v251
    %253 = vmatprep.subr.mxu0 0.0
    %v254 = vand.u32 %v37, 4294901760
    %v255 = vsub.f32 %v37, %v254
    %256 = vmatpush1.msra.mxu0 %v255
    %257 = vmatprep.subr.mxu0 0.0
    %v258 = vand.u32 %v38, 4294901760
    %v259 = vsub.f32 %v38, %v258
    %260 = vmatpush1.msra.mxu0 %v259
    %261 = vmatprep.subr.mxu0 0.0
    %v262 = vand.u32 %v39, 4294901760
    %v263 = vsub.f32 %v39, %v262
    %264 = vmatpush1.msra.mxu0 %v263
    %265 = vmatprep.subr.mxu0 0.0
    %v266 = vand.u32 %v40, 4294901760
    %v267 = vsub.f32 %v40, %v266
    %268 = vmatpush1.msra.mxu0 %v267
    %269 = vmatprep.subr.mxu0 0.0
    %v270 = vand.u32 %v41, 4294901760
    %v271 = vsub.f32 %v41, %v270
    %272 = vmatpush1.msra.mxu0 %v271
    %273 = vmatprep.subr.mxu0 0.0
    %v274 = vand.u32 %v49, 4294901760
    %v275 = vsub.f32 %v49, %v274
    %276 = vmatpush1.msra.mxu0 %v275
    %277 = vmatprep.subr.mxu0 0.0
    %278 = vmatpush1.msra.mxu0 0.0
    %279 = vmatprep.subr.mxu0 0.0
    %280 = vmatpush1.msra.mxu0 0.0
    %281 = vmatprep.subr.mxu0 0.0
    %282 = vmatpush1.msra.mxu0 0.0
    %283 = vmatprep.subr.mxu0 0.0
    %284 = vmatpush1.msra.mxu0 0.0
    %285 = vmatprep.subr.mxu0 0.0
    %286 = vmatpush1.msra.mxu0 0.0
    %287 = vmatprep.subr.mxu0 0.0
    %288 = vmatpush1.msra.mxu0 0.0
    %289 = vmatprep.subr.mxu0 0.0
    %290 = vmatpush1.msra.mxu0 0.0
    %291 = vmatprep.subr.mxu0 0.0
    %292 = vmatpush1.msra.mxu0 0.0
    %293 = vmatprep.subr.mxu0 0.0
    %294 = vmatpush1.msra.mxu0 0.0
    %295 = vmatprep.subr.mxu0 0.0
    %296 = vmatpush1.msra.mxu0 0.0
    %297 = vmatprep.subr.mxu0 0.0
    %298 = vmatpush1.msra.mxu0 0.0
    %299 = vmatprep.subr.mxu0 0.0
    %300 = vmatpush1.msra.mxu0 0.0
    %301 = vmatprep.subr.mxu0 0.0
    %302 = vmatpush1.msra.mxu0 0.0
    %303 = vmatprep.subr.mxu0 0.0
    %304 = vmatpush1.msra.mxu0 0.0
    %305 = vmatprep.subr.mxu0 0.0
    %306 = vmatpush1.msra.mxu0 0.0
    %307 = vmatprep.subr.mxu0 0.0
    %308 = vmatpush1.msra.mxu0 0.0
    %309 = vmatprep.subr.mxu0 0.0
    %310 = vmatpush1.msra.mxu0 0.0
    %311 = vmatprep.subr.mxu0 0.0
    %312 = vmatpush1.msra.mxu0 0.0
    %313 = vmatprep.subr.mxu0 0.0
    %314 = vmatpush1.msra.mxu0 0.0
    %315 = vmatprep.subr.mxu0 0.0
    %316 = vmatpush1.msra.mxu0 0.0
    %317 = vmatprep.subr.mxu0 0.0
    %318 = vmatpush1.msra.mxu0 0.0
    %319 = vmatprep.subr.mxu0 0.0
    %320 = vmatpush1.msra.mxu0 0.0
    %321 = vmatprep.subr.mxu0 0.0
    %322 = vmatpush1.msra.mxu0 0.0
    %323 = vmatprep.subr.mxu0 0.0
    %324 = vmatpush1.msra.mxu0 0.0
    %325 = vmatprep.mubr.f32.mxu0 0.0
    %v326 = vand.u32 %v45, 4294901760
    %v327 = vsub.f32 %v45, %v326
    %328 = vmatmul.mubr.f32.gmra.mrb[0].mxu0 %v327
    %v329 = vpop.f32.mrb[0].mxu0
    %v330 = vadd.f32 %v242, %v329
    %v331 = vpop.f32.mrb[0].mxu0
    %332 = vdwg.mxu0
    %333 = vmatprep.subr.mxu0 0.0
    %v334 = vand.u32 %v35, 4294901760
    %335 = vmatpush1.msra.mxu0 %v334
    %336 = vmatprep.subr.mxu0 0.0
    %v337 = vand.u32 %v36, 4294901760
    %338 = vmatpush1.msra.mxu0 %v337
    %339 = vmatprep.subr.mxu0 0.0
    %v340 = vand.u32 %v37, 4294901760
    %341 = vmatpush1.msra.mxu0 %v340
    %342 = vmatprep.subr.mxu0 0.0
    %v343 = vand.u32 %v38, 4294901760
    %344 = vmatpush1.msra.mxu0 %v343
    %345 = vmatprep.subr.mxu0 0.0
    %v346 = vand.u32 %v39, 4294901760
    %347 = vmatpush1.msra.mxu0 %v346
    %348 = vmatprep.subr.mxu0 0.0
    %v349 = vand.u32 %v40, 4294901760
    %350 = vmatpush1.msra.mxu0 %v349
    %351 = vmatprep.subr.mxu0 0.0
    %v352 = vand.u32 %v41, 4294901760
    %353 = vmatpush1.msra.mxu0 %v352
    %354 = vmatprep.subr.mxu0 0.0
    %v355 = vand.u32 %v49, 4294901760
    %356 = vmatpush1.msra.mxu0 %v355
    %357 = vmatprep.subr.mxu0 0.0
    %358 = vmatpush1.msra.mxu0 0.0
    %359 = vmatprep.subr.mxu0 0.0
    %360 = vmatpush1.msra.mxu0 0.0
    %361 = vmatprep.subr.mxu0 0.0
    %362 = vmatpush1.msra.mxu0 0.0
    %363 = vmatprep.subr.mxu0 0.0
    %364 = vmatpush1.msra.mxu0 0.0
    %365 = vmatprep.subr.mxu0 0.0
    %366 = vmatpush1.msra.mxu0 0.0
    %367 = vmatprep.subr.mxu0 0.0
    %368 = vmatpush1.msra.mxu0 0.0
    %369 = vmatprep.subr.mxu0 0.0
    %370 = vmatpush1.msra.mxu0 0.0
    %371 = vmatprep.subr.mxu0 0.0
    %372 = vmatpush1.msra.mxu0 0.0
    %373 = vmatprep.subr.mxu0 0.0
    %374 = vmatpush1.msra.mxu0 0.0
    %375 = vmatprep.subr.mxu0 0.0
    %376 = vmatpush1.msra.mxu0 0.0
    %377 = vmatprep.subr.mxu0 0.0
    %378 = vmatpush1.msra.mxu0 0.0
    %379 = vmatprep.subr.mxu0 0.0
    %380 = vmatpush1.msra.mxu0 0.0
    %381 = vmatprep.subr.mxu0 0.0
    %382 = vmatpush1.msra.mxu0 0.0
    %383 = vmatprep.subr.mxu0 0.0
    %384 = vmatpush1.msra.mxu0 0.0
    %385 = vmatprep.subr.mxu0 0.0
    %386 = vmatpush1.msra.mxu0 0.0
    %387 = vmatprep.subr.mxu0 0.0
    %388 = vmatpush1.msra.mxu0 0.0
    %389 = vmatprep.subr.mxu0 0.0
    %390 = vmatpush1.msra.mxu0 0.0
    %391 = vmatprep.subr.mxu0 0.0
    %392 = vmatpush1.msra.mxu0 0.0
    %393 = vmatprep.subr.mxu0 0.0
    %394 = vmatpush1.msra.mxu0 0.0
    %395 = vmatprep.subr.mxu0 0.0
    %396 = vmatpush1.msra.mxu0 0.0
    %397 = vmatprep.subr.mxu0 0.0
    %398 = vmatpush1.msra.mxu0 0.0
    %399 = vmatprep.subr.mxu0 0.0
    %400 = vmatpush1.msra.mxu0 0.0
    %401 = vmatprep.subr.mxu0 0.0
    %402 = vmatpush1.msra.mxu0 0.0
    %403 = vmatprep.subr.mxu0 0.0
    %404 = vmatpush1.msra.mxu0 0.0
    %405 = vmatprep.mubr.f32.mxu0 0.0
    %v406 = vand.u32 %v45, 4294901760
    %v407 = vsub.f32 %v45, %v406
    %v408 = vand.u32 %v407, 4294901760
    %409 = vmatmul.mubr.f32.gmra.mrb[0].mxu0 %v408
    %v410 = vpop.f32.mrb[0].mxu0
    %v411 = vadd.f32 %v330, %v410
    %v412 = vpop.f32.mrb[0].mxu0
    %413 = vdwg.mxu0
    %414 = vmatprep.subr.mxu0 0.0
    %v415 = vand.u32 %v35, 4294901760
    %v416 = vsub.f32 %v35, %v415
    %v417 = vand.u32 %v416, 4294901760
    %418 = vmatpush1.msra.mxu0 %v417
    %419 = vmatprep.subr.mxu0 0.0
    %v420 = vand.u32 %v36, 4294901760
    %v421 = vsub.f32 %v36, %v420
    %v422 = vand.u32 %v421, 4294901760
    %423 = vmatpush1.msra.mxu0 %v422
    %424 = vmatprep.subr.mxu0 0.0
    %v425 = vand.u32 %v37, 4294901760
    %v426 = vsub.f32 %v37, %v425
    %v427 = vand.u32 %v426, 4294901760
    %428 = vmatpush1.msra.mxu0 %v427
    %429 = vmatprep.subr.mxu0 0.0
    %v430 = vand.u32 %v38, 4294901760
    %v431 = vsub.f32 %v38, %v430
    %v432 = vand.u32 %v431, 4294901760
    %433 = vmatpush1.msra.mxu0 %v432
    %434 = vmatprep.subr.mxu0 0.0
    %v435 = vand.u32 %v39, 4294901760
    %v436 = vsub.f32 %v39, %v435
    %v437 = vand.u32 %v436, 4294901760
    %438 = vmatpush1.msra.mxu0 %v437
    %439 = vmatprep.subr.mxu0 0.0
    %v440 = vand.u32 %v40, 4294901760
    %v441 = vsub.f32 %v40, %v440
    %v442 = vand.u32 %v441, 4294901760
    %443 = vmatpush1.msra.mxu0 %v442
    %444 = vmatprep.subr.mxu0 0.0
    %v445 = vand.u32 %v41, 4294901760
    %v446 = vsub.f32 %v41, %v445
    %v447 = vand.u32 %v446, 4294901760
    %448 = vmatpush1.msra.mxu0 %v447
    %449 = vmatprep.subr.mxu0 0.0
    %v450 = vand.u32 %v49, 4294901760
    %v451 = vsub.f32 %v49, %v450
    %v452 = vand.u32 %v451, 4294901760
    %453 = vmatpush1.msra.mxu0 %v452
    %454 = vmatprep.subr.mxu0 0.0
    %455 = vmatpush1.msra.mxu0 0.0
    %456 = vmatprep.subr.mxu0 0.0
    %457 = vmatpush1.msra.mxu0 0.0
    %458 = vmatprep.subr.mxu0 0.0
    %459 = vmatpush1.msra.mxu0 0.0
    %460 = vmatprep.subr.mxu0 0.0
    %461 = vmatpush1.msra.mxu0 0.0
    %462 = vmatprep.subr.mxu0 0.0
    %463 = vmatpush1.msra.mxu0 0.0
    %464 = vmatprep.subr.mxu0 0.0
    %465 = vmatpush1.msra.mxu0 0.0
    %466 = vmatprep.subr.mxu0 0.0
    %467 = vmatpush1.msra.mxu0 0.0
    %468 = vmatprep.subr.mxu0 0.0
    %469 = vmatpush1.msra.mxu0 0.0
    %470 = vmatprep.subr.mxu0 0.0
    %471 = vmatpush1.msra.mxu0 0.0
    %472 = vmatprep.subr.mxu0 0.0
    %473 = vmatpush1.msra.mxu0 0.0
    %474 = vmatprep.subr.mxu0 0.0
    %475 = vmatpush1.msra.mxu0 0.0
    %476 = vmatprep.subr.mxu0 0.0
    %477 = vmatpush1.msra.mxu0 0.0
    %478 = vmatprep.subr.mxu0 0.0
    %479 = vmatpush1.msra.mxu0 0.0
    %480 = vmatprep.subr.mxu0 0.0
    %481 = vmatpush1.msra.mxu0 0.0
    %482 = vmatprep.subr.mxu0 0.0
    %483 = vmatpush1.msra.mxu0 0.0
    %484 = vmatprep.subr.mxu0 0.0
    %485 = vmatpush1.msra.mxu0 0.0
    %486 = vmatprep.subr.mxu0 0.0
    %487 = vmatpush1.msra.mxu0 0.0
    %488 = vmatprep.subr.mxu0 0.0
    %489 = vmatpush1.msra.mxu0 0.0
    %490 = vmatprep.subr.mxu0 0.0
    %491 = vmatpush1.msra.mxu0 0.0
    %492 = vmatprep.subr.mxu0 0.0
    %493 = vmatpush1.msra.mxu0 0.0
    %494 = vmatprep.subr.mxu0 0.0
    %495 = vmatpush1.msra.mxu0 0.0
    %496 = vmatprep.subr.mxu0 0.0
    %497 = vmatpush1.msra.mxu0 0.0
    %498 = vmatprep.subr.mxu0 0.0
    %499 = vmatpush1.msra.mxu0 0.0
    %500 = vmatprep.subr.mxu0 0.0
    %501 = vmatpush1.msra.mxu0 0.0
    %502 = vmatprep.mubr.f32.mxu0 0.0
    %v503 = vand.u32 %v45, 4294901760
    %504 = vmatmul.mubr.f32.gmra.mrb[0].mxu0 %v503
    %v505 = vpop.f32.mrb[0].mxu0
    %v506 = vadd.f32 %v411, %v505
    %v507 = vpop.f32.mrb[0].mxu0
    %508 = vdwg.mxu0
    %509 = vmatprep.subr.mxu0 0.0
    %v510 = vand.u32 %v35, 4294901760
    %511 = vmatpush1.msra.mxu0 %v510
    %512 = vmatprep.subr.mxu0 0.0
    %v513 = vand.u32 %v36, 4294901760
    %514 = vmatpush1.msra.mxu0 %v513
    %515 = vmatprep.subr.mxu0 0.0
    %v516 = vand.u32 %v37, 4294901760
    %517 = vmatpush1.msra.mxu0 %v516
    %518 = vmatprep.subr.mxu0 0.0
    %v519 = vand.u32 %v38, 4294901760
    %520 = vmatpush1.msra.mxu0 %v519
    %521 = vmatprep.subr.mxu0 0.0
    %v522 = vand.u32 %v39, 4294901760
    %523 = vmatpush1.msra.mxu0 %v522
    %524 = vmatprep.subr.mxu0 0.0
    %v525 = vand.u32 %v40, 4294901760
    %526 = vmatpush1.msra.mxu0 %v525
    %527 = vmatprep.subr.mxu0 0.0
    %v528 = vand.u32 %v41, 4294901760
    %529 = vmatpush1.msra.mxu0 %v528
    %530 = vmatprep.subr.mxu0 0.0
    %v531 = vand.u32 %v49, 4294901760
    %532 = vmatpush1.msra.mxu0 %v531
    %533 = vmatprep.subr.mxu0 0.0
    %534 = vmatpush1.msra.mxu0 0.0
    %535 = vmatprep.subr.mxu0 0.0
    %536 = vmatpush1.msra.mxu0 0.0
    %537 = vmatprep.subr.mxu0 0.0
    %538 = vmatpush1.msra.mxu0 0.0
    %539 = vmatprep.subr.mxu0 0.0
    %540 = vmatpush1.msra.mxu0 0.0
    %541 = vmatprep.subr.mxu0 0.0
    %542 = vmatpush1.msra.mxu0 0.0
    %543 = vmatprep.subr.mxu0 0.0
    %544 = vmatpush1.msra.mxu0 0.0
    %545 = vmatprep.subr.mxu0 0.0
    %546 = vmatpush1.msra.mxu0 0.0
    %547 = vmatprep.subr.mxu0 0.0
    %548 = vmatpush1.msra.mxu0 0.0
    %549 = vmatprep.subr.mxu0 0.0
    %550 = vmatpush1.msra.mxu0 0.0
    %551 = vmatprep.subr.mxu0 0.0
    %552 = vmatpush1.msra.mxu0 0.0
    %553 = vmatprep.subr.mxu0 0.0
    %554 = vmatpush1.msra.mxu0 0.0
    %555 = vmatprep.subr.mxu0 0.0
    %556 = vmatpush1.msra.mxu0 0.0
    %557 = vmatprep.subr.mxu0 0.0
    %558 = vmatpush1.msra.mxu0 0.0
    %559 = vmatprep.subr.mxu0 0.0
    %560 = vmatpush1.msra.mxu0 0.0
    %561 = vmatprep.subr.mxu0 0.0
    %562 = vmatpush1.msra.mxu0 0.0
    %563 = vmatprep.subr.mxu0 0.0
    %564 = vmatpush1.msra.mxu0 0.0
    %565 = vmatprep.subr.mxu0 0.0
    %566 = vmatpush1.msra.mxu0 0.0
    %567 = vmatprep.subr.mxu0 0.0
    %568 = vmatpush1.msra.mxu0 0.0
    %569 = vmatprep.subr.mxu0 0.0
    %570 = vmatpush1.msra.mxu0 0.0
    %571 = vmatprep.subr.mxu0 0.0
    %572 = vmatpush1.msra.mxu0 0.0
    %573 = vmatprep.subr.mxu0 0.0
    %574 = vmatpush1.msra.mxu0 0.0
    %575 = vmatprep.subr.mxu0 0.0
    %576 = vmatpush1.msra.mxu0 0.0
    %577 = vmatprep.subr.mxu0 0.0
    %578 = vmatpush1.msra.mxu0 0.0
    %579 = vmatprep.subr.mxu0 0.0
    %580 = vmatpush1.msra.mxu0 0.0
    %581 = vmatprep.mubr.f32.mxu0 0.0
    %v582 = vand.u32 %v45, 4294901760
    %583 = vmatmul.mubr.f32.gmra.mrb[0].mxu0 %v582
    %v584 = vpop.f32.mrb[0].mxu0
    %v585 = vadd.f32 %v506, %v584
    %v586 = vpop.f32.mrb[0].mxu0
    %587 = vdwg.mxu0
    %v588 = vmul.f32 %v585, 1.5707964
    %v589 = vand.u32 2147483647, %v588
    %vm590 = vcmp.le.f32.partialorder %v589, 0.7853982
    %vm591 = vcmp.lt.s32.totalorder %v588, 0
    %v592 = vand.u32 %v588, 2139095040
    %v593 = vshrl.u32 %v592, 23
    %v594 = vsub.s32 %v593, 127
    %v595 = vand.u32 2147483647, %v588
    %v596 = vand.u32 %v595, 8388607
    %v597 = vor.u32 %v596, 8388608
    %v598 = vsub.s32 0, %v597
    %v599 = vadd.s32 %v594, 1
    %vm600 = vcmp.gt.s32.totalorder %v599, 0
    %v601 = vsel %vm600, %v599, 0
    %v602 = vshrl.u32 %v601, 5
    %v603 = vand.u32 %v601, 31
    %v604 = vsub.s32 32, %v603
    %v605 = vshrl.u32 683565275, %v604
    %v606 = vshll.u32 683565275, %v603
    %v607 = vshrl.u32 2475754826, %v604
    %v608 = vor.u32 %v606, %v607
    %v609 = vshll.u32 2475754826, %v603
    %v610 = vshrl.u32 2131351028, %v604
    %v611 = vor.u32 %v609, %v610
    %v612 = vshll.u32 2131351028, %v603
    %v613 = vshrl.u32 2102212464, %v604
    %v614 = vor.u32 %v612, %v613
    %v615 = vshll.u32 2102212464, %v603
    %v616 = vshrl.u32 920167782, %v604
    %v617 = vor.u32 %v615, %v616
    %v618 = vshll.u32 920167782, %v603
    %v619 = vshrl.u32 1326507024, %v604
    %v620 = vor.u32 %v618, %v619
    %vm621 = vcmp.lt.s32.totalorder %v602, 1
    %vm622 = vcmp.lt.s32.totalorder %v602, 2
    %vm623 = vcmp.lt.s32.totalorder %v602, 3
    %vm624 = vcmp.lt.s32.totalorder %v602, 4
    %v625 = vsel %vm621, %v605, %v608
    %v626 = vsel %vm624, %v614, 2102212464
    %v627 = vsel %vm623, %v611, %v626
    %v628 = vsel %vm622, %v625, %v627
    %v629 = vsel %vm621, %v608, %v611
    %v630 = vsel %vm624, %v617, 920167782
    %v631 = vsel %vm623, %v614, %v630
    %v632 = vsel %vm622, %v629, %v631
    %v633 = vsel %vm621, %v611, %v614
    %v634 = vsel %vm624, %v620, 1326507024
    %v635 = vsel %vm623, %v617, %v634
    %v636 = vsel %vm622, %v633, %v635
    %v637 = vshll.u32 %v597, 8
    %v638 = vmul.u32.u64.compose %v637, %v636
    %v639 = vextract.low.u32 %v638
    %v640 = vextract.high.u32 %v638
    %v641 = vmul.u32.u64.compose %v637, %v632
    %v642 = vextract.low.u32 %v641
    %v643 = vextract.high.u32 %v641
    %v644 = vmul.u32 %v637, %v628
    %v645 = vadd.s32 %v640, %v642
    %vm646 = vc.u32 %v640, %v642
    %v647 = vadd.s32 %v643, 1
    %v648 = vsel %vm646, %v647, %v643
    %v649 = vadd.s32 %v644, %v648
    %v650 = vadd.s32 %v649, 536870912
    %v651 = vshrl.u32 %v650, 30
    %v652 = vshll.u32 %v651, 30
    %v653 = vsub.s32 %v649, %v652
    %vm654 = vcmp.lt.s32.totalorder %v653, 0
    %v655 = vsub.s32 0, %v653
    %v656 = vsel %vm654, %v655, %v653
    %v657 = vclz %v656
    %v658 = vsub.s32 %v657, 2
    %vm659 = vcmp.gt.s32.totalorder 0, %v658
    %v660 = vsel %vm659, 0, %v658
    %v661 = vsub.s32 32, %v660
    %v662 = vshll.u32 %v653, %v660
    %v663 = vshrl.u32 %v645, %v661
    %v664 = vor.u32 %v662, %v663
    %v665 = vsub.s32 4294967266, %v660
    %v666 = vadd.s32 %v665, 127
    %v667 = vshll.u32 %v666, 23
    %v668 = vor.u32 4788187, %v667
    %v669 = vand.u32 2147483647, %v668
    %v671 = vcvt.s32.f32 %v664
    %v672 = vmul.f32 %v671, %v669
    %v673 = vxor.u32 %v672, 2147483648
    %v674 = vsel %vm591, %v673, %v672
    %v675 = vsub.s32 4, %v651
    %v676 = vsel %vm591, %v675, %v651
    %v677 = vsel %vm590, %v588, %v674
    %v678 = vsel %vm590, 0, %v676
    %v679 = vcosq.f32.pop %v677
    %v680 = vsinq.f32.pop %v677
    %vm681 = vweird.f32 %v588
    %v682 = vadd.s32 %v678, 3
    %v683 = vand.u32 %v682, 3
    %vm684 = vcmp.lt.s32.totalorder %v683, 2
    %vm685 = vcmp.eq.s32.totalorder %v683, 0
    %v686 = vxor.u32 %v680, 2147483648
    %v687 = vsel %vm685, %v679, %v686
    %vm688 = vcmp.eq.s32.totalorder %v683, 2
    %v689 = vxor.u32 %v679, 2147483648
    %v690 = vsel %vm688, %v689, %v680
    %v691 = vsel %vm684, %v687, %v690
    %v692 = vsel %vm681, nan, %v691
    %v693 = vand.u32 2147483647, %v692
    %vm694 = vcmask 146432
    %v695 = vsel %vm694, %v693, 0.0
    %696 = vadd.xlane.f32.xlu0 %v695
    %v697 = vpop.xlane.xlu0 %696
    %v698 = vrot.slane %v697, 4
    %v699 = vadd.f32 %v697, %v698
    %v700 = vrot.slane %v699, 2
    %v701 = vadd.f32 %v699, %v700
    %v702 = vrot.slane %v701, 1
    %v703 = vadd.f32 %v701, %v702
    %s704 = vtos %v703
    %s705 = smul.f32 %s33, 0.8
    %v706 = vrcp.pop -504.0
    %s707 = vtos %v706
    %s708 = smul.f32 %s705, %s707
    %s709 = smul.f32 %s704, 0.2
    %v710 = vrcp.pop 144.0
    %s711 = vtos %v710
    %s712 = smul.f32 %s709, %s711
    %s713 = sadd.f32 %s708, %s712
    %s714 = scalar_lea.smem [#allocation2], 0
    %715 = sst [smem:[%s714]] %s713
    // Predicated region
    $region18: #{loss_fn.1} parent=1 // pred_check
      _
    $region19: #{loss_fn.1} parent=1 // pred_check_branch
      %717 = sbr.rel (0) target = $region21
    $region20: #{loss_fn.1} parent=1 // pred_region
      %s719 = ssub.s32 16, 16
      %720 = vsyncadd [#allocation3], %s719
      %723 = dma.smem_to_hbm [#allocation2], 16, %s4, [#allocation3]
    $region21: #{loss_fn.1} parent=1 // pred_fallthru
      _
    // Predicated region
    $region22: #{loss_fn.1} parent=1 // pred_check
      _
    $region23: #{loss_fn.1} parent=1 // pred_check_branch
      %725 = sbr.rel (0) target = $region25
    $region24: #{loss_fn.1} parent=1 // pred_region
      %726 = dma.done [#allocation3], 16
    $region25: #{loss_fn.1} parent=1 // pred_fallthru
      _
    %727 = sfence
    %728 = vsyncpa [#allocation3], 1

</llo_original>
